<compile_context>
chip_gen: v5e
topology: v5e:2x2
jax: 0.10.0
libtpu: 0.0.40
codegen_flags: <defaults>
</compile_context>

<pallas_src>
import math
import functools

import jax
import jax.numpy as jnp
from jax import lax
from jax.experimental import pallas as pl
from jax.experimental.pallas import tpu as pltpu


def _pick_tile(dim, target, align):
    """Largest tile <= target that divides `dim` and is a multiple of `align`;
    falls back to the full dim (always legal as a block size)."""
    if dim <= target:
        return dim
    t = (target // align) * align
    while t >= align:
        if dim % t == 0:
            return t
        t -= align
    return dim


def _pick_group(n_heads, max_g=4):
    """Largest head-group size <= max_g dividing n_heads (G~4 fits v7x's
    32 MiB scoped VMEM budget for the grouped QKV weight block)."""
    for g in range(min(n_heads, max_g), 0, -1):
        if n_heads % g == 0:
            return g
    return 1


# --------------------- 1) head-grouped fused QKV projection ------------------

def _qkv_proj_kernel(x_ref, w_ref, q_ref, k_ref, v_ref, *, head_dim, group,
                     scale):
    x = x_ref[0]                                  # (ts, H)       bf16
    for g in range(group):                        # static unroll over heads
        w = w_ref[g]                              # (H, 3*hd)     bf16
        qkv = jnp.dot(x, w, preferred_element_type=jnp.float32)  # (ts, 3*hd)
        # 1/sqrt(hd) folded into the Q epilogue (once per element) instead of
        # a (tq x tk) multiply in the attention kv inner loop.
        q_ref[0, g] = (qkv[:, :head_dim] * scale).astype(q_ref.dtype)
        k_ref[0, g] = qkv[:, head_dim:2 * head_dim].astype(k_ref.dtype)
        v_ref[0, g] = qkv[:, 2 * head_dim:].astype(v_ref.dtype)


# --------------------- 2) flash-style attention ------------------------------

def _flash_attn_kernel(q_ref, k_ref, v_ref, bias_ref, o_ref, m_sc, l_sc,
                       acc_sc):
    ki = pl.program_id(3)

    @pl.when(ki == 0)
    def _():
        m_sc[...] = jnp.full_like(m_sc, -jnp.inf)
        l_sc[...] = jnp.zeros_like(l_sc)
        acc_sc[...] = jnp.zeros_like(acc_sc)

    q = q_ref[0, 0]                               # (tq, hd) bf16 (pre-scaled)
    k = k_ref[0, 0]                               # (tk, hd) bf16
    v = v_ref[0, 0]                               # (tk, hd) bf16

    # baddbmm(alibi, q, k^T, beta=1, alpha=1/sqrt(hd)); alpha already folded
    # into q, alibi(+mask) already folded into the single bf16 bias stream.
    s = lax.dot_general(q, k, dimension_numbers=(((1,), (1,)), ((), ())),
                        preferred_element_type=jnp.float32)      # (tq, tk) f32
    s = s + bias_ref[0, 0].astype(jnp.float32)

    m_prev = m_sc[...]
    m_new = jnp.maximum(m_prev, jnp.max(s, axis=-1, keepdims=True))
    alpha = jnp.exp(m_prev - m_new)
    p = jnp.exp(s - m_new)                                        # f32 softmax
    l_sc[...] = alpha * l_sc[...] + jnp.sum(p, axis=-1, keepdims=True)
    acc_sc[...] = alpha * acc_sc[...] + jnp.dot(
        p.astype(v.dtype), v, preferred_element_type=jnp.float32)
    m_sc[...] = m_new

    @pl.when(ki == pl.num_programs(3) - 1)
    def _():
        o_ref[0, 0] = (acc_sc[...] *
                       pl.reciprocal(l_sc[...], approx=True)).astype(o_ref.dtype)


# --------------------- 3) tiled output projection ----------------------------

def _out_proj_kernel(c_ref, w_ref, o_ref, acc_ref):
    kc = pl.program_id(3)

    @pl.when(kc == 0)
    def _():
        acc_ref[...] = jnp.zeros_like(acc_ref)

    acc_ref[...] += jnp.dot(c_ref[0], w_ref[...],
                            preferred_element_type=jnp.float32)

    @pl.when(kc == pl.num_programs(3) - 1)
    def _():
        o_ref[0] = acc_ref[...].astype(o_ref.dtype)


# --------------------- weight prep (run once, not per call) ------------------

def prepare_attention_params(wq, wk, wv, wo, *, n_heads):
    """One-time MXU-ready weight layouts (transposes/concat/bf16 cast hoisted
    out of the per-forward wrapper)."""
    H = wq.shape[1]
    hd = H // n_heads
    wq_t = wq.reshape(n_heads, hd, H).transpose(0, 2, 1)         # (nh, H, hd)
    wk_t = wk.reshape(n_heads, hd, H).transpose(0, 2, 1)
    wv_t = wv.reshape(n_heads, hd, H).transpose(0, 2, 1)
    wqkv = jnp.concatenate([wq_t, wk_t, wv_t], axis=-1).astype(jnp.bfloat16)
    wo_t = wo.T.astype(jnp.bfloat16)                             # (H, H)
    return wqkv, wo_t


# --------------------- forward ------------------------------------------------

def llmp_attention_fwd(x, wqkv, wo_t, alibi, attention_mask=None, *, n_heads):
    """x: (B,S,H); wqkv: (nh,H,3*hd) bf16; wo_t: (H,H) bf16;
    alibi: (B*n_heads,S,S); attention_mask: (B,1,S,>=S) additive or None."""
    B, S, H = x.shape
    hd = H // n_heads
    scale = 1.0 / math.sqrt(hd)

    x_b = x.astype(jnp.bfloat16)

    # ALiBi (+ optional additive mask, broadcast over heads) combined ONCE in
    # the wrapper and streamed as a single bf16 tensor.  Bias values are kept
    # as an input (they are arbitrary per the module API), just halved in
    # width; upcast to f32 inside the kernel before the add.
    bias = alibi.reshape(B, n_heads, S, S).astype(jnp.float32)
    if attention_mask is not None:
        bias = bias + attention_mask[:, :, :, :S].astype(jnp.float32)
    bias = bias.astype(jnp.bfloat16)

    # Tile sizes: full dims at small shapes, (8,128)-aligned tiles at large.
    ts = _pick_tile(S, 512, 8)        # projection row tile
    tq = _pick_tile(S, 256, 8)        # attention query tile (256-wide MXU)
    tk = _pick_tile(S, 512, 128)      # attention kv tile (lane dim of scores)
    tm = _pick_tile(S, 512, 8)        # out-proj row tile (halves wo re-reads)
    tn = _pick_tile(H, 256, 128)      # out-proj output tile
    tc = _pick_tile(H, 512, 128)      # out-proj contraction tile
    G = _pick_group(n_heads, 4)       # QKV head group per grid step

    # --- head-grouped fused QKV projection ---
    # s-tile axis innermost: the weight block index (hg,0,0) is unchanged
    # across consecutive si steps, so Pallas keeps the (G,H,3hd) weight slab
    # resident (DMA'd once) while x streams; x is re-read only nh/G times.
    qkv_out = jax.ShapeDtypeStruct((B, n_heads, S, hd), jnp.bfloat16)
    q, k, v = pl.pallas_call(
        functools.partial(_qkv_proj_kernel, head_dim=hd, group=G, scale=scale),
        out_shape=(qkv_out, qkv_out, qkv_out),
        grid=(B, n_heads // G, S // ts),
        in_specs=[
            pl.BlockSpec((1, ts, H), lambda b, hg, si: (b, si, 0)),
            pl.BlockSpec((G, H, 3 * hd), lambda b, hg, si: (hg, 0, 0)),
        ],
        out_specs=(
            pl.BlockSpec((1, G, ts, hd), lambda b, hg, si: (b, hg, si, 0)),
            pl.BlockSpec((1, G, ts, hd), lambda b, hg, si: (b, hg, si, 0)),
            pl.BlockSpec((1, G, ts, hd), lambda b, hg, si: (b, hg, si, 0)),
        ),
        compiler_params=pltpu.CompilerParams(
            dimension_semantics=("parallel", "parallel", "parallel"),
            vmem_limit_bytes=32 * 1024 * 1024),  # explicit budget (v7x-safe)
    )(x_b, wqkv)

    # --- flash attention ---
    comb = pl.pallas_call(
        _flash_attn_kernel,
        out_shape=jax.ShapeDtypeStruct((B, n_heads, S, hd), jnp.bfloat16),
        grid=(B, n_heads, S // tq, S // tk),
        in_specs=[
            pl.BlockSpec((1, 1, tq, hd), lambda b, h, qi, ki: (b, h, qi, 0)),
            pl.BlockSpec((1, 1, tk, hd), lambda b, h, qi, ki: (b, h, ki, 0)),
            pl.BlockSpec((1, 1, tk, hd), lambda b, h, qi, ki: (b, h, ki, 0)),
            pl.BlockSpec((1, 1, tq, tk), lambda b, h, qi, ki: (b, h, qi, ki)),
        ],
        out_specs=pl.BlockSpec((1, 1, tq, hd),
                               lambda b, h, qi, ki: (b, h, qi, 0)),
        scratch_shapes=[
            pltpu.VMEM((tq, 1), jnp.float32),      # running max
            pltpu.VMEM((tq, 1), jnp.float32),      # running sum
            pltpu.VMEM((tq, hd), jnp.float32),     # output accumulator
        ],
        compiler_params=pltpu.CompilerParams(
            dimension_semantics=("parallel", "parallel", "parallel",
                                 "arbitrary")),
    )(q, k, v, bias)

    # PyTorch: .view(batch_, -1, hidden_size) WITHOUT transposing heads back
    # (bug-for-bug faithful, row-major reinterpret).
    comb_flat = comb.reshape(B, -1, H)              # (B, S, H) bf16

    # --- tiled output projection ---
    out = pl.pallas_call(
        _out_proj_kernel,
        out_shape=jax.ShapeDtypeStruct((B, S, H), jnp.float32),
        grid=(B, S // tm, H // tn, H // tc),
        in_specs=[
            pl.BlockSpec((1, tm, tc), lambda b, si, nj, kc: (b, si, kc)),
            pl.BlockSpec((tc, tn), lambda b, si, nj, kc: (kc, nj)),
        ],
        out_specs=pl.BlockSpec((1, tm, tn), lambda b, si, nj, kc: (b, si, nj)),
        scratch_shapes=[pltpu.VMEM((tm, tn), jnp.float32)],
        compiler_params=pltpu.CompilerParams(
            dimension_semantics=("parallel", "parallel", "parallel",
                                 "arbitrary")),
    )(comb_flat, wo_t)
    return out


def llmp_attention(x, wq, wk, wv, wo, alibi, attention_mask=None, *, n_heads):
    """Convenience wrapper (prep + forward). Prefer calling
    prepare_attention_params once and llmp_attention_fwd per step."""
    wqkv, wo_t = prepare_attention_params(wq, wk, wv, wo, n_heads=n_heads)
    return llmp_attention_fwd(x, wqkv, wo_t, alibi, attention_mask,
                              n_heads=n_heads)


def _reference(x, wq, wk, wv, wo, alibi, attention_mask, *, n_heads):
    """Pure-JAX f32 replica of the PyTorch forward (eval mode)."""
    B, S, H = x.shape
    hd = H // n_heads
    q = (x @ wq.T).reshape(B, S, n_heads, hd).transpose(0, 2, 1, 3)
    k = (x @ wk.T).reshape(B, S, n_heads, hd).transpose(0, 2, 1, 3)
    v = (x @ wv.T).reshape(B, S, n_heads, hd).transpose(0, 2, 1, 3)
    scores = alibi.reshape(B, n_heads, S, S) + \
        jnp.einsum('bhqd,bhkd->bhqk', q, k) / math.sqrt(hd)
    if attention_mask is not None:
        scores = scores + attention_mask[:, :, :, :S]
    attn = jax.nn.softmax(scores, axis=-1)
    comb = jnp.einsum('bhqk,bhkd->bhqd', attn, v).reshape(B, -1, H)
    return comb @ wo.T


if __name__ == "__main__":
    B, S, n_heads, H = 2, 8, 4, 32
    hd = H // n_heads

    key = jax.random.PRNGKey(0)
    kx, kq, kk, kv_, ko = jax.random.split(key, 5)
    init_scale = 1.0 / math.sqrt(H)
    x = jax.random.normal(kx, (B, S, H), jnp.float32)
    wq = jax.random.normal(kq, (H, H), jnp.float32) * init_scale
    wk = jax.random.normal(kk, (H, H), jnp.float32) * init_scale
    wv = jax.random.normal(kv_, (H, H), jnp.float32) * init_scale
    wo = jax.random.normal(ko, (H, H), jnp.float32) * init_scale

    # ALiBi-style bias: (B * n_heads, S, S)
    slopes = 2.0 ** (-jnp.arange(1, n_heads + 1, dtype=jnp.float32))
    rel = (jnp.arange(S)[None, :] - jnp.arange(S)[:, None]).astype(jnp.float32)
    alibi = jnp.tile(slopes[:, None, None] * rel[None], (B, 1, 1))

    # Additive causal attention mask: (B, 1, S, S)
    causal = jnp.tril(jnp.ones((S, S), jnp.float32))
    attention_mask = jnp.broadcast_to(
        jnp.where(causal == 1.0, 0.0, -1e9)[None, None], (B, 1, S, S))

    # Weight prep hoisted out of the forward path (done once).
    wqkv, wo_t = prepare_attention_params(wq, wk, wv, wo, n_heads=n_heads)

    out = llmp_attention_fwd(x, wqkv, wo_t, alibi, attention_mask,
                             n_heads=n_heads)
    out = jax.block_until_ready(out)

    ref = _reference(x, wq, wk, wv, wo, alibi, attention_mask, n_heads=n_heads)
    assert out.shape == (B, S, H)
    # bf16 matmul operands + bf16 bias stream -> looser tolerance vs f32 ref.
    err = float(jnp.max(jnp.abs(out - ref)))
    ref_mag = float(jnp.max(jnp.abs(ref)))
    assert err <= 0.05 * max(ref_mag, 1.0), f"max abs err {err} (ref mag {ref_mag})"

    print("KERNEL_OK")
</pallas_src>

<mosaic_0001>
module attributes {stable_mosaic.version = 11 : i64} {
  func.func @_qkv_proj_kernel(%arg0: i32, %arg1: i32, %arg2: i32, %arg3: memref<1x8x32xbf16, #tpu.memory_space<vmem>>, %arg4: memref<4x32x24xbf16, #tpu.memory_space<vmem>>, %arg5: memref<1x4x8x8xbf16, #tpu.memory_space<vmem>>, %arg6: memref<1x4x8x8xbf16, #tpu.memory_space<vmem>>, %arg7: memref<1x4x8x8xbf16, #tpu.memory_space<vmem>>) attributes {dimension_semantics = [#tpu.dimension_semantics<parallel>, #tpu.dimension_semantics<parallel>, #tpu.dimension_semantics<parallel>], iteration_bounds = array<i64: 2, 1, 1>, scalar_prefetch = 0 : i64, scratch_operands = 0 : i64, tpu.core_type = #tpu.core_type<tc>, window_params = [{transform_indices = @transform_0, window_bounds = array<i64: 1, 8, 32>}, {transform_indices = @transform_1, window_bounds = array<i64: 4, 32, 24>}, {transform_indices = @transform_2, window_bounds = array<i64: 1, 4, 8, 8>}, {transform_indices = @transform_3, window_bounds = array<i64: 1, 4, 8, 8>}, {transform_indices = @transform_4, window_bounds = array<i64: 1, 4, 8, 8>}]} {
    %c0 = arith.constant 0 : index
    %c0_0 = arith.constant 0 : index
    %c0_1 = arith.constant 0 : index
    %0 = vector.load %arg3[%c0, %c0_0, %c0_1] : memref<1x8x32xbf16, #tpu.memory_space<vmem>>, vector<1x8x32xbf16>
    %1 = vector.shape_cast %0 : vector<1x8x32xbf16> to vector<8x32xbf16>
    %c0_2 = arith.constant 0 : index
    %c0_3 = arith.constant 0 : index
    %c0_4 = arith.constant 0 : index
    %2 = vector.load %arg4[%c0_2, %c0_3, %c0_4] : memref<4x32x24xbf16, #tpu.memory_space<vmem>>, vector<1x32x24xbf16>
    %3 = vector.shape_cast %2 : vector<1x32x24xbf16> to vector<32x24xbf16>
    %cst = arith.constant dense<0.000000e+00> : vector<8x24xf32>
    %4 = tpu.matmul %1, %3, %cst {dimension_numbers = #tpu.dot_dimension_numbers<[1], [0], [0], [1], [0, 0, 1, 1], [], []>} : vector<8x32xbf16>, vector<32x24xbf16>, vector<8x24xf32> -> vector<8x24xf32>
    %5 = vector.extract_strided_slice %4 {offsets = [0, 0], sizes = [8, 8], strides = [1, 1]} : vector<8x24xf32> to vector<8x8xf32>
    %cst_5 = arith.constant 0.353553385 : f32
    %6 = vector.broadcast %cst_5 : f32 to vector<8x8xf32>
    %7 = arith.mulf %5, %6 : vector<8x8xf32>
    %8 = arith.truncf %7 : vector<8x8xf32> to vector<8x8xbf16>
    %c0_6 = arith.constant 0 : index
    %c0_7 = arith.constant 0 : index
    %c0_8 = arith.constant 0 : index
    %c0_9 = arith.constant 0 : index
    %9 = vector.load %arg5[%c0_6, %c0_7, %c0_8, %c0_9] : memref<1x4x8x8xbf16, #tpu.memory_space<vmem>>, vector<1x1x8x8xbf16>
    %10 = vector.shape_cast %9 : vector<1x1x8x8xbf16> to vector<8x8xbf16>
    %11 = vector.shape_cast %8 : vector<8x8xbf16> to vector<1x1x8x8xbf16>
    tpu.vector_store %arg5[%c0_6, %c0_7, %c0_8, %c0_9], %11 {strides = array<i32>} : memref<1x4x8x8xbf16, #tpu.memory_space<vmem>>, vector<1x1x8x8xbf16>,
    %12 = vector.extract_strided_slice %4 {offsets = [0, 8], sizes = [8, 8], strides = [1, 1]} : vector<8x24xf32> to vector<8x8xf32>
    %13 = arith.truncf %12 : vector<8x8xf32> to vector<8x8xbf16>
    %c0_10 = arith.constant 0 : index
    %c0_11 = arith.constant 0 : index
    %c0_12 = arith.constant 0 : index
    %c0_13 = arith.constant 0 : index
    %14 = vector.load %arg6[%c0_10, %c0_11, %c0_12, %c0_13] : memref<1x4x8x8xbf16, #tpu.memory_space<vmem>>, vector<1x1x8x8xbf16>
    %15 = vector.shape_cast %14 : vector<1x1x8x8xbf16> to vector<8x8xbf16>
    %16 = vector.shape_cast %13 : vector<8x8xbf16> to vector<1x1x8x8xbf16>
    tpu.vector_store %arg6[%c0_10, %c0_11, %c0_12, %c0_13], %16 {strides = array<i32>} : memref<1x4x8x8xbf16, #tpu.memory_space<vmem>>, vector<1x1x8x8xbf16>,
    %17 = vector.extract_strided_slice %4 {offsets = [0, 16], sizes = [8, 8], strides = [1, 1]} : vector<8x24xf32> to vector<8x8xf32>
    %18 = arith.truncf %17 : vector<8x8xf32> to vector<8x8xbf16>
    %c0_14 = arith.constant 0 : index
    %c0_15 = arith.constant 0 : index
    %c0_16 = arith.constant 0 : index
    %c0_17 = arith.constant 0 : index
    %19 = vector.load %arg7[%c0_14, %c0_15, %c0_16, %c0_17] : memref<1x4x8x8xbf16, #tpu.memory_space<vmem>>, vector<1x1x8x8xbf16>
    %20 = vector.shape_cast %19 : vector<1x1x8x8xbf16> to vector<8x8xbf16>
    %21 = vector.shape_cast %18 : vector<8x8xbf16> to vector<1x1x8x8xbf16>
    tpu.vector_store %arg7[%c0_14, %c0_15, %c0_16, %c0_17], %21 {strides = array<i32>} : memref<1x4x8x8xbf16, #tpu.memory_space<vmem>>, vector<1x1x8x8xbf16>,
    %c1 = arith.constant 1 : index
    %c0_18 = arith.constant 0 : index
    %c0_19 = arith.constant 0 : index
    %22 = vector.load %arg4[%c1, %c0_18, %c0_19] : memref<4x32x24xbf16, #tpu.memory_space<vmem>>, vector<1x32x24xbf16>
    %23 = vector.shape_cast %22 : vector<1x32x24xbf16> to vector<32x24xbf16>
    %cst_20 = arith.constant dense<0.000000e+00> : vector<8x24xf32>
    %24 = tpu.matmul %1, %23, %cst_20 {dimension_numbers = #tpu.dot_dimension_numbers<[1], [0], [0], [1], [0, 0, 1, 1], [], []>} : vector<8x32xbf16>, vector<32x24xbf16>, vector<8x24xf32> -> vector<8x24xf32>
    %25 = vector.extract_strided_slice %24 {offsets = [0, 0], sizes = [8, 8], strides = [1, 1]} : vector<8x24xf32> to vector<8x8xf32>
    %cst_21 = arith.constant 0.353553385 : f32
    %26 = vector.broadcast %cst_21 : f32 to vector<8x8xf32>
    %27 = arith.mulf %25, %26 : vector<8x8xf32>
    %28 = arith.truncf %27 : vector<8x8xf32> to vector<8x8xbf16>
    %c0_22 = arith.constant 0 : index
    %c1_23 = arith.constant 1 : index
    %c0_24 = arith.constant 0 : index
    %c0_25 = arith.constant 0 : index
    %29 = vector.load %arg5[%c0_22, %c1_23, %c0_24, %c0_25] : memref<1x4x8x8xbf16, #tpu.memory_space<vmem>>, vector<1x1x8x8xbf16>
    %30 = vector.shape_cast %29 : vector<1x1x8x8xbf16> to vector<8x8xbf16>
    %31 = vector.shape_cast %28 : vector<8x8xbf16> to vector<1x1x8x8xbf16>
    tpu.vector_store %arg5[%c0_22, %c1_23, %c0_24, %c0_25], %31 {strides = array<i32>} : memref<1x4x8x8xbf16, #tpu.memory_space<vmem>>, vector<1x1x8x8xbf16>,
    %32 = vector.extract_strided_slice %24 {offsets = [0, 8], sizes = [8, 8], strides = [1, 1]} : vector<8x24xf32> to vector<8x8xf32>
    %33 = arith.truncf %32 : vector<8x8xf32> to vector<8x8xbf16>
    %c0_26 = arith.constant 0 : index
    %c1_27 = arith.constant 1 : index
    %c0_28 = arith.constant 0 : index
    %c0_29 = arith.constant 0 : index
    %34 = vector.load %arg6[%c0_26, %c1_27, %c0_28, %c0_29] : memref<1x4x8x8xbf16, #tpu.memory_space<vmem>>, vector<1x1x8x8xbf16>
    %35 = vector.shape_cast %34 : vector<1x1x8x8xbf16> to vector<8x8xbf16>
    %36 = vector.shape_cast %33 : vector<8x8xbf16> to vector<1x1x8x8xbf16>
    tpu.vector_store %arg6[%c0_26, %c1_27, %c0_28, %c0_29], %36 {strides = array<i32>} : memref<1x4x8x8xbf16, #tpu.memory_space<vmem>>, vector<1x1x8x8xbf16>,
    %37 = vector.extract_strided_slice %24 {offsets = [0, 16], sizes = [8, 8], strides = [1, 1]} : vector<8x24xf32> to vector<8x8xf32>
    %38 = arith.truncf %37 : vector<8x8xf32> to vector<8x8xbf16>
    %c0_30 = arith.constant 0 : index
    %c1_31 = arith.constant 1 : index
    %c0_32 = arith.constant 0 : index
    %c0_33 = arith.constant 0 : index
    %39 = vector.load %arg7[%c0_30, %c1_31, %c0_32, %c0_33] : memref<1x4x8x8xbf16, #tpu.memory_space<vmem>>, vector<1x1x8x8xbf16>
    %40 = vector.shape_cast %39 : vector<1x1x8x8xbf16> to vector<8x8xbf16>
    %41 = vector.shape_cast %38 : vector<8x8xbf16> to vector<1x1x8x8xbf16>
    tpu.vector_store %arg7[%c0_30, %c1_31, %c0_32, %c0_33], %41 {strides = array<i32>} : memref<1x4x8x8xbf16, #tpu.memory_space<vmem>>, vector<1x1x8x8xbf16>,
    %c2 = arith.constant 2 : index
    %c0_34 = arith.constant 0 : index
    %c0_35 = arith.constant 0 : index
    %42 = vector.load %arg4[%c2, %c0_34, %c0_35] : memref<4x32x24xbf16, #tpu.memory_space<vmem>>, vector<1x32x24xbf16>
    %43 = vector.shape_cast %42 : vector<1x32x24xbf16> to vector<32x24xbf16>
    %cst_36 = arith.constant dense<0.000000e+00> : vector<8x24xf32>
    %44 = tpu.matmul %1, %43, %cst_36 {dimension_numbers = #tpu.dot_dimension_numbers<[1], [0], [0], [1], [0, 0, 1, 1], [], []>} : vector<8x32xbf16>, vector<32x24xbf16>, vector<8x24xf32> -> vector<8x24xf32>
    %45 = vector.extract_strided_slice %44 {offsets = [0, 0], sizes = [8, 8], strides = [1, 1]} : vector<8x24xf32> to vector<8x8xf32>
    %cst_37 = arith.constant 0.353553385 : f32
    %46 = vector.broadcast %cst_37 : f32 to vector<8x8xf32>
    %47 = arith.mulf %45, %46 : vector<8x8xf32>
    %48 = arith.truncf %47 : vector<8x8xf32> to vector<8x8xbf16>
    %c0_38 = arith.constant 0 : index
    %c2_39 = arith.constant 2 : index
    %c0_40 = arith.constant 0 : index
    %c0_41 = arith.constant 0 : index
    %49 = vector.load %arg5[%c0_38, %c2_39, %c0_40, %c0_41] : memref<1x4x8x8xbf16, #tpu.memory_space<vmem>>, vector<1x1x8x8xbf16>
    %50 = vector.shape_cast %49 : vector<1x1x8x8xbf16> to vector<8x8xbf16>
    %51 = vector.shape_cast %48 : vector<8x8xbf16> to vector<1x1x8x8xbf16>
    tpu.vector_store %arg5[%c0_38, %c2_39, %c0_40, %c0_41], %51 {strides = array<i32>} : memref<1x4x8x8xbf16, #tpu.memory_space<vmem>>, vector<1x1x8x8xbf16>,
    %52 = vector.extract_strided_slice %44 {offsets = [0, 8], sizes = [8, 8], strides = [1, 1]} : vector<8x24xf32> to vector<8x8xf32>
    %53 = arith.truncf %52 : vector<8x8xf32> to vector<8x8xbf16>
    %c0_42 = arith.constant 0 : index
    %c2_43 = arith.constant 2 : index
    %c0_44 = arith.constant 0 : index
    %c0_45 = arith.constant 0 : index
    %54 = vector.load %arg6[%c0_42, %c2_43, %c0_44, %c0_45] : memref<1x4x8x8xbf16, #tpu.memory_space<vmem>>, vector<1x1x8x8xbf16>
    %55 = vector.shape_cast %54 : vector<1x1x8x8xbf16> to vector<8x8xbf16>
    %56 = vector.shape_cast %53 : vector<8x8xbf16> to vector<1x1x8x8xbf16>
    tpu.vector_store %arg6[%c0_42, %c2_43, %c0_44, %c0_45], %56 {strides = array<i32>} : memref<1x4x8x8xbf16, #tpu.memory_space<vmem>>, vector<1x1x8x8xbf16>,
    %57 = vector.extract_strided_slice %44 {offsets = [0, 16], sizes = [8, 8], strides = [1, 1]} : vector<8x24xf32> to vector<8x8xf32>
    %58 = arith.truncf %57 : vector<8x8xf32> to vector<8x8xbf16>
    %c0_46 = arith.constant 0 : index
    %c2_47 = arith.constant 2 : index
    %c0_48 = arith.constant 0 : index
    %c0_49 = arith.constant 0 : index
    %59 = vector.load %arg7[%c0_46, %c2_47, %c0_48, %c0_49] : memref<1x4x8x8xbf16, #tpu.memory_space<vmem>>, vector<1x1x8x8xbf16>
    %60 = vector.shape_cast %59 : vector<1x1x8x8xbf16> to vector<8x8xbf16>
    %61 = vector.shape_cast %58 : vector<8x8xbf16> to vector<1x1x8x8xbf16>
    tpu.vector_store %arg7[%c0_46, %c2_47, %c0_48, %c0_49], %61 {strides = array<i32>} : memref<1x4x8x8xbf16, #tpu.memory_space<vmem>>, vector<1x1x8x8xbf16>,
    %c3 = arith.constant 3 : index
    %c0_50 = arith.constant 0 : index
    %c0_51 = arith.constant 0 : index
    %62 = vector.load %arg4[%c3, %c0_50, %c0_51] : memref<4x32x24xbf16, #tpu.memory_space<vmem>>, vector<1x32x24xbf16>
    %63 = vector.shape_cast %62 : vector<1x32x24xbf16> to vector<32x24xbf16>
    %cst_52 = arith.constant dense<0.000000e+00> : vector<8x24xf32>
    %64 = tpu.matmul %1, %63, %cst_52 {dimension_numbers = #tpu.dot_dimension_numbers<[1], [0], [0], [1], [0, 0, 1, 1], [], []>} : vector<8x32xbf16>, vector<32x24xbf16>, vector<8x24xf32> -> vector<8x24xf32>
    %65 = vector.extract_strided_slice %64 {offsets = [0, 0], sizes = [8, 8], strides = [1, 1]} : vector<8x24xf32> to vector<8x8xf32>
    %cst_53 = arith.constant 0.353553385 : f32
    %66 = vector.broadcast %cst_53 : f32 to vector<8x8xf32>
    %67 = arith.mulf %65, %66 : vector<8x8xf32>
    %68 = arith.truncf %67 : vector<8x8xf32> to vector<8x8xbf16>
    %c0_54 = arith.constant 0 : index
    %c3_55 = arith.constant 3 : index
    %c0_56 = arith.constant 0 : index
    %c0_57 = arith.constant 0 : index
    %69 = vector.load %arg5[%c0_54, %c3_55, %c0_56, %c0_57] : memref<1x4x8x8xbf16, #tpu.memory_space<vmem>>, vector<1x1x8x8xbf16>
    %70 = vector.shape_cast %69 : vector<1x1x8x8xbf16> to vector<8x8xbf16>
    %71 = vector.shape_cast %68 : vector<8x8xbf16> to vector<1x1x8x8xbf16>
    tpu.vector_store %arg5[%c0_54, %c3_55, %c0_56, %c0_57], %71 {strides = array<i32>} : memref<1x4x8x8xbf16, #tpu.memory_space<vmem>>, vector<1x1x8x8xbf16>,
    %72 = vector.extract_strided_slice %64 {offsets = [0, 8], sizes = [8, 8], strides = [1, 1]} : vector<8x24xf32> to vector<8x8xf32>
    %73 = arith.truncf %72 : vector<8x8xf32> to vector<8x8xbf16>
    %c0_58 = arith.constant 0 : index
    %c3_59 = arith.constant 3 : index
    %c0_60 = arith.constant 0 : index
    %c0_61 = arith.constant 0 : index
    %74 = vector.load %arg6[%c0_58, %c3_59, %c0_60, %c0_61] : memref<1x4x8x8xbf16, #tpu.memory_space<vmem>>, vector<1x1x8x8xbf16>
    %75 = vector.shape_cast %74 : vector<1x1x8x8xbf16> to vector<8x8xbf16>
    %76 = vector.shape_cast %73 : vector<8x8xbf16> to vector<1x1x8x8xbf16>
    tpu.vector_store %arg6[%c0_58, %c3_59, %c0_60, %c0_61], %76 {strides = array<i32>} : memref<1x4x8x8xbf16, #tpu.memory_space<vmem>>, vector<1x1x8x8xbf16>,
    %77 = vector.extract_strided_slice %64 {offsets = [0, 16], sizes = [8, 8], strides = [1, 1]} : vector<8x24xf32> to vector<8x8xf32>
    %78 = arith.truncf %77 : vector<8x8xf32> to vector<8x8xbf16>
    %c0_62 = arith.constant 0 : index
    %c3_63 = arith.constant 3 : index
    %c0_64 = arith.constant 0 : index
    %c0_65 = arith.constant 0 : index
    %79 = vector.load %arg7[%c0_62, %c3_63, %c0_64, %c0_65] : memref<1x4x8x8xbf16, #tpu.memory_space<vmem>>, vector<1x1x8x8xbf16>
    %80 = vector.shape_cast %79 : vector<1x1x8x8xbf16> to vector<8x8xbf16>
    %81 = vector.shape_cast %78 : vector<8x8xbf16> to vector<1x1x8x8xbf16>
    tpu.vector_store %arg7[%c0_62, %c3_63, %c0_64, %c0_65], %81 {strides = array<i32>} : memref<1x4x8x8xbf16, #tpu.memory_space<vmem>>, vector<1x1x8x8xbf16>,
    return
  }
  func.func @transform_0(%arg0: i32, %arg1: i32, %arg2: i32) -> (i32, i32, i32) {
    %c0_i32 = arith.constant 0 : i32
    %c0_i32_0 = arith.constant 0 : i32
    return %arg0, %arg2, %c0_i32 : i32, i32, i32
  }
  func.func @transform_1(%arg0: i32, %arg1: i32, %arg2: i32) -> (i32, i32, i32) {
    %c0_i32 = arith.constant 0 : i32
    %c0_i32_0 = arith.constant 0 : i32
    %c0_i32_1 = arith.constant 0 : i32
    return %arg1, %c0_i32, %c0_i32_0 : i32, i32, i32
  }
  func.func @transform_2(%arg0: i32, %arg1: i32, %arg2: i32) -> (i32, i32, i32, i32) {
    %c0_i32 = arith.constant 0 : i32
    %c0_i32_0 = arith.constant 0 : i32
    return %arg0, %arg1, %arg2, %c0_i32 : i32, i32, i32, i32
  }
  func.func @transform_3(%arg0: i32, %arg1: i32, %arg2: i32) -> (i32, i32, i32, i32) {
    %c0_i32 = arith.constant 0 : i32
    %c0_i32_0 = arith.constant 0 : i32
    return %arg0, %arg1, %arg2, %c0_i32 : i32, i32, i32, i32
  }
  func.func @transform_4(%arg0: i32, %arg1: i32, %arg2: i32) -> (i32, i32, i32, i32) {
    %c0_i32 = arith.constant 0 : i32
    %c0_i32_0 = arith.constant 0 : i32
    return %arg0, %arg1, %arg2, %c0_i32 : i32, i32, i32, i32
  }
}

</mosaic_0001>

<llo_original>
// kernel: tpu_custom_call.1
$region0: #{tpu_custom_call.1}
  #allocation0 [shape = 'u32[]', space=smem, size = 0x4, offset = 0x4, fixed_abs, tag = 'smem constant byte address 0x4 - core index']
  #allocation1 [shape = 'u32[72,128]{1,0:T(1,128)}', space=vmem, size = 0x9000, scoped, tag = 'internal scratch']
  %s0 = inlined_call_operand.vmem [shape: bf16[2,8,32], index: 0, kind: input, shape index: {}]
  %s1 = inlined_call_operand.vmem [shape: bf16[4,32,24], index: 1, kind: input, shape index: {}]
  %s2 = inlined_call_operand.hbm [shape: bf16[2,4,8,8], index: 2, kind: output, shape index: {0}]
  %s3 = inlined_call_operand.hbm [shape: bf16[2,4,8,8], index: 3, kind: output, shape index: {1}]
  %s4 = inlined_call_operand.hbm [shape: bf16[2,4,8,8], index: 4, kind: output, shape index: {2}]
  %5 = xla_tuple %s2, %s3, %s4
  %s6 = sld [smem:[#allocation0]]
  $region57: #{tpu_custom_call.1} parent=0
    _
  %s8 = ssub.s32 1, %s6
  %s9 = scalar_select 0, %s8, %s6
  $region1: #{tpu_custom_call.1} parent=0
    #allocation2 [shape = 'u8[16384]{0}', space=vmem, size = 0x4000, scoped, tag = 'output window, operand 0']
    #allocation3 [shape = 's32[2]{0}', space=sflag, size = 0x8, scoped, tag = 'scoped memory for tpu_custom_call.1']
    #allocation4 [shape = 'u8[16384]{0}', space=vmem, size = 0x4000, scoped, tag = 'output window, operand 1']
    #allocation5 [shape = 's32[2]{0}', space=sflag, size = 0x8, scoped, tag = 'scoped memory for tpu_custom_call.1']
    #allocation6 [shape = 'u8[16384]{0}', space=vmem, size = 0x4000, scoped, tag = 'output window, operand 2']
    %10 = vsyncpa [#allocation3], 0
    %s11 = scalar_lea.sflag [#allocation3], 1
    %12 = vsyncpa %s11, 0
    %13 = vsyncpa [#allocation5], 0
    %s14 = scalar_lea.sflag [#allocation5], 1
    %15 = vsyncpa %s14, 0
    loop: start=0, step=1, limit=4
    $region2: #{tpu_custom_call.1} parent=1 // loop_pre_header
      _
    $region3: #{tpu_custom_call.1} parent=1 // loop_header
      %s17 = sphi 0, %s21
      %p18 = scmp.ge.s32.totalorder %s17, 4
      %s24 = sphi 0, %s43
      %s25 = sphi 0, %s39
      %s26 = sphi 0, %s35
      %s27 = sphi 0, %s24
      %s28 = sphi 0, %s25
      %s29 = sphi 0, %s26
      %s30 = sphi 0, %s27
      %s31 = sphi 0, %s28
      %s32 = sphi 0, %s29
      %s48 = sphi 0, %s50
      %s51 = sphi 0, %s48
      %s52 = sphi 0, %s51
      %s68 = sphi 0, %s52
      %s74 = sphi 0, %s76
      %s77 = sphi 0, %s74
      %s78 = sphi 0, %s77
      %s94 = sphi 0, %s78
      %s104 = sphi 0, %s106
      %s107 = sphi 0, %s104
      %s108 = sphi 0, %s107
      %s124 = sphi 0, %s108
      %s134 = sphi 0, %s136
      %s137 = sphi 0, %s134
      %s138 = sphi 0, %s137
      %s154 = sphi 0, %s138
      %s164 = sphi 0, %s166
      %s167 = sphi 0, %s164
      %s168 = sphi 0, %s167
      %s184 = sphi 0, %s168
    $region4: #{tpu_custom_call.1} parent=1 // loop_header_branch
      %20 = sbr.rel (%p18) target = $region8
    $region5: #{tpu_custom_call.1} parent=1 // loop_body
      %s22 = ssub.s32 %s17, 1
      %s23 = ssub.s32 %s17, 2
      %s33 = sadd.s32 1, %s26
      %p34 = scmp.ge.s32.totalorder %s33, 1
      %s35 = scalar_select %p34, 0, %s33
      %s36 = sadd.s32 1, %s25
      %s37 = scalar_select %p34, %s36, %s25
      %p38 = scmp.ge.s32.totalorder %s37, 1
      %s39 = scalar_select %p38, 0, %s37
      %s40 = sadd.s32 1, %s24
      %s41 = scalar_select %p38, %s40, %s24
      %p42 = scmp.ge.s32.totalorder %s41, 2
      %s43 = scalar_select %p42, 0, %s41
      %s44 = ssub.s32 %s24, %s43
      %s45 = ssub.s32 %s26, %s35
      %s46 = sor.u32 %s44, %s45
      %p47 = scmp.eq.s32.totalorder %s46, 0
      %s49 = sadd.s32 %s48, 1
      %s50 = scalar_select %p47, %s48, %s49
      %p53 = pneg %p47
      %p54 = scmp.eq.s32.totalorder %s17, 1
      %p55 = por %p53, %p54
      %p56 = scmp.ne.s32.totalorder %s48, %s51
      %p57 = scmp.eq.s32.totalorder %s17, 0
      %p58 = por %p56, %p57
      %p59 = scmp.ne.s32.totalorder %s48, %s51
      %p60 = scmp.eq.s32.totalorder %s22, 1
      %p61 = por %p59, %p60
      %p62 = scmp.ne.s32.totalorder %s51, %s52
      %p63 = scmp.eq.s32.totalorder %s22, 0
      %p64 = por %p62, %p63
      %p65 = scmp.ne.s32.totalorder %s51, %s52
      %p66 = scmp.eq.s32.totalorder %s23, 1
      %p67 = por %p65, %p66
      %p69 = scmp.ne.s32.totalorder %s52, %s68
      %p70 = scmp.eq.s32.totalorder %s23, 0
      %p71 = por %p69, %p70
      %s72 = ssub.s32 %s25, %s39
      %p73 = scmp.eq.s32.totalorder %s72, 0
      %s75 = sadd.s32 %s74, 1
      %s76 = scalar_select %p73, %s74, %s75
      %p79 = pneg %p73
      %p80 = scmp.eq.s32.totalorder %s17, 1
      %p81 = por %p79, %p80
      %p82 = scmp.ne.s32.totalorder %s74, %s77
      %p83 = scmp.eq.s32.totalorder %s17, 0
      %p84 = por %p82, %p83
      %p85 = scmp.ne.s32.totalorder %s74, %s77
      %p86 = scmp.eq.s32.totalorder %s22, 1
      %p87 = por %p85, %p86
      %p88 = scmp.ne.s32.totalorder %s77, %s78
      %p89 = scmp.eq.s32.totalorder %s22, 0
      %p90 = por %p88, %p89
      %p91 = scmp.ne.s32.totalorder %s77, %s78
      %p92 = scmp.eq.s32.totalorder %s23, 1
      %p93 = por %p91, %p92
      %p95 = scmp.ne.s32.totalorder %s78, %s94
      %p96 = scmp.eq.s32.totalorder %s23, 0
      %p97 = por %p95, %p96
      %s98 = ssub.s32 %s24, %s43
      %s99 = ssub.s32 %s25, %s39
      %s100 = sor.u32 %s98, %s99
      %s101 = ssub.s32 %s26, %s35
      %s102 = sor.u32 %s100, %s101
      %p103 = scmp.eq.s32.totalorder %s102, 0
      %s105 = sadd.s32 %s104, 1
      %s106 = scalar_select %p103, %s104, %s105
      %p109 = pneg %p103
      %p110 = scmp.eq.s32.totalorder %s17, 1
      %p111 = por %p109, %p110
      %p112 = scmp.ne.s32.totalorder %s104, %s107
      %p113 = scmp.eq.s32.totalorder %s17, 0
      %p114 = por %p112, %p113
      %p115 = scmp.ne.s32.totalorder %s104, %s107
      %p116 = scmp.eq.s32.totalorder %s22, 1
      %p117 = por %p115, %p116
      %p118 = scmp.ne.s32.totalorder %s107, %s108
      %p119 = scmp.eq.s32.totalorder %s22, 0
      %p120 = por %p118, %p119
      %p121 = scmp.ne.s32.totalorder %s107, %s108
      %p122 = scmp.eq.s32.totalorder %s23, 1
      %p123 = por %p121, %p122
      %p125 = scmp.ne.s32.totalorder %s108, %s124
      %p126 = scmp.eq.s32.totalorder %s23, 0
      %p127 = por %p125, %p126
      %s128 = ssub.s32 %s24, %s43
      %s129 = ssub.s32 %s25, %s39
      %s130 = sor.u32 %s128, %s129
      %s131 = ssub.s32 %s26, %s35
      %s132 = sor.u32 %s130, %s131
      %p133 = scmp.eq.s32.totalorder %s132, 0
      %s135 = sadd.s32 %s134, 1
      %s136 = scalar_select %p133, %s134, %s135
      %p139 = pneg %p133
      %p140 = scmp.eq.s32.totalorder %s17, 1
      %p141 = por %p139, %p140
      %p142 = scmp.ne.s32.totalorder %s134, %s137
      %p143 = scmp.eq.s32.totalorder %s17, 0
      %p144 = por %p142, %p143
      %p145 = scmp.ne.s32.totalorder %s134, %s137
      %p146 = scmp.eq.s32.totalorder %s22, 1
      %p147 = por %p145, %p146
      %p148 = scmp.ne.s32.totalorder %s137, %s138
      %p149 = scmp.eq.s32.totalorder %s22, 0
      %p150 = por %p148, %p149
      %p151 = scmp.ne.s32.totalorder %s137, %s138
      %p152 = scmp.eq.s32.totalorder %s23, 1
      %p153 = por %p151, %p152
      %p155 = scmp.ne.s32.totalorder %s138, %s154
      %p156 = scmp.eq.s32.totalorder %s23, 0
      %p157 = por %p155, %p156
      %s158 = ssub.s32 %s24, %s43
      %s159 = ssub.s32 %s25, %s39
      %s160 = sor.u32 %s158, %s159
      %s161 = ssub.s32 %s26, %s35
      %s162 = sor.u32 %s160, %s161
      %p163 = scmp.eq.s32.totalorder %s162, 0
      %s165 = sadd.s32 %s164, 1
      %s166 = scalar_select %p163, %s164, %s165
      %p169 = pneg %p163
      %p170 = scmp.eq.s32.totalorder %s17, 1
      %p171 = por %p169, %p170
      %p172 = scmp.ne.s32.totalorder %s164, %s167
      %p173 = scmp.eq.s32.totalorder %s17, 0
      %p174 = por %p172, %p173
      %p175 = scmp.ne.s32.totalorder %s164, %s167
      %p176 = scmp.eq.s32.totalorder %s22, 1
      %p177 = por %p175, %p176
      %p178 = scmp.ne.s32.totalorder %s167, %s168
      %p179 = scmp.eq.s32.totalorder %s22, 0
      %p180 = por %p178, %p179
      %p181 = scmp.ne.s32.totalorder %s167, %s168
      %p182 = scmp.eq.s32.totalorder %s23, 1
      %p183 = por %p181, %p182
      %p185 = scmp.ne.s32.totalorder %s168, %s184
      %p186 = scmp.eq.s32.totalorder %s23, 0
      %p187 = por %p185, %p186
      %p188 = scmp.le.s32.totalorder 1, %s17
      %p189 = scmp.lt.s32.totalorder %s17, 3
      %p190 = pnand %p188, %p189
      %p191 = pneg %p190
      // Predicated region
      $region9: #{tpu_custom_call.1} parent=5 // pred_check
        _
      $region10: #{tpu_custom_call.1} parent=5 // pred_check_branch
        %193 = sbr.rel (%p190) target = $region12
      $region11: #{tpu_custom_call.1} parent=5 // pred_region
        %s194 = ssub.s32 %s17, 1
        // Predicated region
        $region13: #{tpu_custom_call.1} parent=11 // pred_check
          %p195 = pneg %p90
        $region14: #{tpu_custom_call.1} parent=11 // pred_check_branch
          %197 = sbr.rel (%p195) target = $region16
        $region15: #{tpu_custom_call.1} parent=11 // pred_region
          %s198 = smul.u32 4, %s28
          %p199 = scmp.lt.s32.totalorder %s198, 3
          %s200 = scalar_select %p199, %s198, 3
          %s201 = smul.addr %s200, 4
          %s202 = smul.addr %s201, 4
          %s203 = scalar_lea.vmem %s1, %s202
          %s204 = smul.u32 4, %s28
        $region16: #{tpu_custom_call.1} parent=11 // pred_fallthru
          _
      $region12: #{tpu_custom_call.1} parent=5 // pred_fallthru
        _
      %p205 = scmp.lt.s32.totalorder %s17, 2
      // Predicated region
      $region17: #{tpu_custom_call.1} parent=5 // pred_check
        %p206 = pneg %p205
      $region18: #{tpu_custom_call.1} parent=5 // pred_check_branch
        %208 = sbr.rel (%p206) target = $region20
      $region19: #{tpu_custom_call.1} parent=5 // pred_region
        // Predicated region
        $region21: #{tpu_custom_call.1} parent=19 // pred_check
          %p209 = pneg %p58
        $region22: #{tpu_custom_call.1} parent=19 // pred_check_branch
          %211 = sbr.rel (%p209) target = $region24
        $region23: #{tpu_custom_call.1} parent=19 // pred_region
          %p212 = scmp.lt.s32.totalorder %s24, 1
          %s213 = scalar_select %p212, %s24, 1
          %p214 = scmp.lt.s32.totalorder %s26, 0
          %s215 = scalar_select %p214, %s26, 0
          %s216 = sadd.s32 %s215, %s213
          %s217 = smul.addr %s216, 4
          %s218 = scalar_lea.vmem %s0, %s217
        $region24: #{tpu_custom_call.1} parent=19 // pred_fallthru
          _
      $region20: #{tpu_custom_call.1} parent=5 // pred_fallthru
        _
      %p219 = scmp.le.s32.totalorder 1, %s17
      %p220 = scmp.lt.s32.totalorder %s17, 3
      %p221 = pnand %p219, %p220
      %p222 = pneg %p221
      // Predicated region
      $region25: #{tpu_custom_call.1} parent=5 // pred_check
        _
      $region26: #{tpu_custom_call.1} parent=5 // pred_check_branch
        %224 = sbr.rel (%p221) target = $region28
      $region27: #{tpu_custom_call.1} parent=5 // pred_region
        %s225 = ssub.s32 %s17, 1
        %p226 = scmp.lt.s32.totalorder %s27, 1
        %s227 = scalar_select %p226, %s27, 1
        %p228 = scmp.lt.s32.totalorder %s29, 0
        %s229 = scalar_select %p228, %s29, 0
        %s230 = sadd.s32 %s229, %s227
        %s231 = smul.addr %s230, 4
        %s232 = scalar_lea.vmem %s0, %s231
        %p233 = pneg %p64
        %p234 = pneg %p61
        %s235 = smul.u32 4, %s28
        %p236 = scmp.lt.s32.totalorder %s235, 3
        %s237 = scalar_select %p236, %s235, 3
        %s238 = smul.addr %s237, 4
        %s239 = smul.addr %s238, 4
        %s240 = scalar_lea.vmem %s1, %s239
        %p241 = pneg %p90
        %p242 = pneg %p87
        %p243 = pneg %p120
        %p244 = pneg %p117
        %s245 = sand.u32 %s107, 1
        %s246 = scalar_lea.sflag [#allocation3], %s245
        %s247 = sand.u32 %s107, 1
        %s248 = smul.addr %s247, 16
        %s249 = scalar_lea.vmem [#allocation2], %s248
        %p250 = pneg %p150
        %p251 = pneg %p147
        %s252 = sand.u32 %s22, 1
        %s253 = scalar_lea.sflag [#allocation5], %s252
        %s254 = sand.u32 %s137, 1
        %s255 = smul.addr %s254, 16
        %s256 = scalar_lea.vmem [#allocation4], %s255
        %p257 = pneg %p180
        %p258 = pneg %p177
        %s259 = sand.u32 %s22, 1
        %s260 = scalar_lea.sflag [#allocation5], %s259
        %s261 = sand.u32 %s167, 1
        %s262 = smul.addr %s261, 16
        %s263 = scalar_lea.vmem [#allocation6], %s262
        %p264 = scmp.lt.s32.totalorder %s27, 1
        %s265 = scalar_select %p264, %s27, 1
        %p266 = scmp.lt.s32.totalorder %s29, 0
        %s267 = scalar_select %p266, %s29, 0
        %s268 = sadd.s32 %s267, %s265
        %s269 = smul.addr %s268, 4
        %s270 = scalar_lea.vmem %s0, %s269
        %s271 = smul.u32 4, %s28
        %p272 = scmp.lt.s32.totalorder %s271, 3
        %s273 = scalar_select %p272, %s271, 3
        %s274 = smul.addr %s273, 4
        %s275 = smul.addr %s274, 4
        %s276 = scalar_lea.vmem %s1, %s275
        %s277 = smul.u32 4, %s28
        %s278 = smul.u32 4, %s28
        %s279 = smul.u32 4, %s28
        %s280 = smul.u32 4, %s28
        %v282 = vld [vmem:[%s270] sm:$0xf]
        %v283 = vld [vmem:[%s276] sm:$0xf]
        %v284 = vld [vmem:[%s276 + $0x4] sm:$0xf]
        %v285 = vld [vmem:[%s276 + $0x8] sm:$0xf]
        %v286 = vld [vmem:[%s276 + $0xc] sm:$0xf]
        %v291 = vunpack.c.l.b16 %v283
        %v292 = vunpack.c.l.b16 %v284
        %v293 = vunpack.c.l.b16 %v285
        %v294 = vunpack.c.l.b16 %v286
        %v295 = vpack.c.b16 %v292, %v291
        %v296 = vpack.c.b16 %v294, %v293
        %vm299 = vcmask 261120
        %v301 = vsel %vm299, %v282, 0
        %303 = vmatpush.bf16.msra.mxu0 0
        %304 = vmatpush.bf16.msra.mxu0 0
        %305 = vmatpush.bf16.msra.mxu0 0
        %306 = vmatpush.bf16.msra.mxu0 0
        %307 = vmatpush.bf16.msra.mxu0 0
        %308 = vmatpush.bf16.msra.mxu0 0
        %309 = vmatpush.bf16.msra.mxu0 %v296
        %310 = vmatpush.bf16.msra.mxu0 %v295
        %311 = vmatmul.bf16.gmra.mxu0 %v301
        %v312 = vpop.f32.mrf.mxu0
        %v313 = vadd.f32 0.0, %v312
        %v314 = vpop.f32.mrf.mxu0
        %315 = vdwg.mxu0
        %v316 = vmul.f32 %v313, 0.35355338
        %v317 = vpack.c.bf16 %v316, %v316
        %vm318 = vcmask 60416
        %319 = vst.msk [vmem:[%s249] sm:$0xf] %vm318, %v317
        %v320 = vpack.c.bf16 %v313, %v313
        %322 = vrot.lane.b32.xlu0 %v320, 120
        %v323 = vpop.permute.xlu0 %322
        %325 = vst.msk [vmem:[%s256] sm:$0xf] %vm318, %v323
        %326 = vrot.lane.b32.xlu0 %v320, 112
        %v327 = vpop.permute.xlu0 %326
        %329 = vst.msk [vmem:[%s263] sm:$0xf] %vm318, %v327
        %s330 = scalar_lea.vmem %s276, 16
        %v331 = vld [vmem:[%s330] sm:$0xf]
        %v332 = vld [vmem:[%s330 + $0x4] sm:$0xf]
        %v333 = vld [vmem:[%s330 + $0x8] sm:$0xf]
        %v334 = vld [vmem:[%s330 + $0xc] sm:$0xf]
        %v339 = vunpack.c.l.b16 %v331
        %v340 = vunpack.c.l.b16 %v332
        %v341 = vunpack.c.l.b16 %v333
        %v342 = vunpack.c.l.b16 %v334
        %v343 = vpack.c.b16 %v340, %v339
        %v344 = vpack.c.b16 %v342, %v341
        %347 = vmatpush.bf16.msra.mxu0 0
        %348 = vmatpush.bf16.msra.mxu0 0
        %349 = vmatpush.bf16.msra.mxu0 0
        %350 = vmatpush.bf16.msra.mxu0 0
        %351 = vmatpush.bf16.msra.mxu0 0
        %352 = vmatpush.bf16.msra.mxu0 0
        %353 = vmatpush.bf16.msra.mxu0 %v344
        %354 = vmatpush.bf16.msra.mxu0 %v343
        %355 = vmatmul.bf16.gmra.mxu0 %v301
        %v356 = vpop.f32.mrf.mxu0
        %v357 = vadd.f32 0.0, %v356
        %v358 = vpop.f32.mrf.mxu0
        %359 = vdwg.mxu0
        %v360 = vmul.f32 %v357, 0.35355338
        %v361 = vpack.c.bf16 %v360, %v360
        %s362 = scalar_lea.vmem %s249, 4 [#allocation2]
        %363 = vst.msk [vmem:[%s362] sm:$0xf] %vm318, %v361
        %v364 = vpack.c.bf16 %v357, %v357
        %366 = vrot.lane.b32.xlu0 %v364, 120
        %v367 = vpop.permute.xlu0 %366
        %s369 = scalar_lea.vmem %s256, 4 [#allocation4]
        %370 = vst.msk [vmem:[%s369] sm:$0xf] %vm318, %v367
        %371 = vrot.lane.b32.xlu0 %v364, 112
        %v372 = vpop.permute.xlu0 %371
        %s374 = scalar_lea.vmem %s263, 4 [#allocation6]
        %375 = vst.msk [vmem:[%s374] sm:$0xf] %vm318, %v372
        %s376 = scalar_lea.vmem %s276, 32
        %v377 = vld [vmem:[%s376] sm:$0xf]
        %v378 = vld [vmem:[%s376 + $0x4] sm:$0xf]
        %v379 = vld [vmem:[%s376 + $0x8] sm:$0xf]
        %v380 = vld [vmem:[%s376 + $0xc] sm:$0xf]
        %v385 = vunpack.c.l.b16 %v377
        %v386 = vunpack.c.l.b16 %v378
        %v387 = vunpack.c.l.b16 %v379
        %v388 = vunpack.c.l.b16 %v380
        %v389 = vpack.c.b16 %v386, %v385
        %v390 = vpack.c.b16 %v388, %v387
        %393 = vmatpush.bf16.msra.mxu0 0
        %394 = vmatpush.bf16.msra.mxu0 0
        %395 = vmatpush.bf16.msra.mxu0 0
        %396 = vmatpush.bf16.msra.mxu0 0
        %397 = vmatpush.bf16.msra.mxu0 0
        %398 = vmatpush.bf16.msra.mxu0 0
        %399 = vmatpush.bf16.msra.mxu0 %v390
        %400 = vmatpush.bf16.msra.mxu0 %v389
        %401 = vmatmul.bf16.gmra.mxu0 %v301
        %v402 = vpop.f32.mrf.mxu0
        %v403 = vadd.f32 0.0, %v402
        %v404 = vpop.f32.mrf.mxu0
        %405 = vdwg.mxu0
        %v406 = vmul.f32 %v403, 0.35355338
        %v407 = vpack.c.bf16 %v406, %v406
        %s408 = scalar_lea.vmem %s249, 8 [#allocation2]
        %409 = vst.msk [vmem:[%s408] sm:$0xf] %vm318, %v407
        %v410 = vpack.c.bf16 %v403, %v403
        %412 = vrot.lane.b32.xlu0 %v410, 120
        %v413 = vpop.permute.xlu0 %412
        %s415 = scalar_lea.vmem %s256, 8 [#allocation4]
        %416 = vst.msk [vmem:[%s415] sm:$0xf] %vm318, %v413
        %417 = vrot.lane.b32.xlu0 %v410, 112
        %v418 = vpop.permute.xlu0 %417
        %s420 = scalar_lea.vmem %s263, 8 [#allocation6]
        %421 = vst.msk [vmem:[%s420] sm:$0xf] %vm318, %v418
        %s422 = scalar_lea.vmem %s276, 48
        %v423 = vld [vmem:[%s422] sm:$0xf]
        %v424 = vld [vmem:[%s422 + $0x4] sm:$0xf]
        %v425 = vld [vmem:[%s422 + $0x8] sm:$0xf]
        %v426 = vld [vmem:[%s422 + $0xc] sm:$0xf]
        %v431 = vunpack.c.l.b16 %v423
        %v432 = vunpack.c.l.b16 %v424
        %v433 = vunpack.c.l.b16 %v425
        %v434 = vunpack.c.l.b16 %v426
        %v435 = vpack.c.b16 %v432, %v431
        %v436 = vpack.c.b16 %v434, %v433
        %439 = vmatpush.bf16.msra.mxu0 0
        %440 = vmatpush.bf16.msra.mxu0 0
        %441 = vmatpush.bf16.msra.mxu0 0
        %442 = vmatpush.bf16.msra.mxu0 0
        %443 = vmatpush.bf16.msra.mxu0 0
        %444 = vmatpush.bf16.msra.mxu0 0
        %445 = vmatpush.bf16.msra.mxu0 %v436
        %446 = vmatpush.bf16.msra.mxu0 %v435
        %447 = vmatmul.bf16.gmra.mxu0 %v301
        %v448 = vpop.f32.mrf.mxu0
        %v449 = vadd.f32 0.0, %v448
        %v450 = vpop.f32.mrf.mxu0
        %451 = vdwg.mxu0
        %v452 = vmul.f32 %v449, 0.35355338
        %v453 = vpack.c.bf16 %v452, %v452
        %s454 = scalar_lea.vmem %s249, 12 [#allocation2]
        %455 = vst.msk [vmem:[%s454] sm:$0xf] %vm318, %v453
        %v456 = vpack.c.bf16 %v449, %v449
        %458 = vrot.lane.b32.xlu0 %v456, 120
        %v459 = vpop.permute.xlu0 %458
        %s461 = scalar_lea.vmem %s256, 12 [#allocation4]
        %462 = vst.msk [vmem:[%s461] sm:$0xf] %vm318, %v459
        %463 = vrot.lane.b32.xlu0 %v456, 112
        %v464 = vpop.permute.xlu0 %463
        %s466 = scalar_lea.vmem %s263, 12 [#allocation6]
        %467 = vst.msk [vmem:[%s466] sm:$0xf] %vm318, %v464
        %s468 = sand.u32 %s107, 1
        %s469 = scalar_lea.sflag [#allocation3], %s468
        %s470 = sand.u32 %s107, 1
        %s471 = smul.addr %s470, 16
        %s472 = scalar_lea.vmem [#allocation2], %s471
        %s473 = sand.u32 %s22, 1
        %s474 = scalar_lea.sflag [#allocation5], %s473
        %s475 = sand.u32 %s137, 1
        %s476 = smul.addr %s475, 16
        %s477 = scalar_lea.vmem [#allocation4], %s476
        %s478 = sand.u32 %s22, 1
        %s479 = scalar_lea.sflag [#allocation5], %s478
        %s480 = sand.u32 %s167, 1
        %s481 = smul.addr %s480, 16
        %s482 = scalar_lea.vmem [#allocation6], %s481
        // Predicated region
        $region29: #{tpu_custom_call.1} parent=27 // pred_check
          %p483 = pneg %p117
        $region30: #{tpu_custom_call.1} parent=27 // pred_check_branch
          %485 = sbr.rel (%p483) target = $region32
        $region31: #{tpu_custom_call.1} parent=27 // pred_region
          %s486 = smul.u32 4, %s28
          %488 = vsyncadd %s469, 0
          %s489 = sadd.s32 %s29, %s486
          %s490 = smul.addr %s27, 4
          %s491 = sadd.s32 %s489, %s490
          %s492 = smul.addr %s491, 4
          %s493 = scalar_lea.hbm %s2, %s492
          %s494 = sshll.u32 %s472, 4
          %s495 = int_to_ptr.vmem [resolvable:$true] %s494
          %s496 = sshll.u32 %s493, 4
          %s497 = int_to_ptr.hbm [resolvable:$true] %s496
          %502 = dma.vmem_to_hbm [thread:$0]  %s495, 256, %s497, %s469, 64, 64, 4
        $region32: #{tpu_custom_call.1} parent=27 // pred_fallthru
          _
        // Predicated region
        $region33: #{tpu_custom_call.1} parent=27 // pred_check
          %p503 = pneg %p147
        $region34: #{tpu_custom_call.1} parent=27 // pred_check_branch
          %505 = sbr.rel (%p503) target = $region36
        $region35: #{tpu_custom_call.1} parent=27 // pred_region
          %s506 = smul.u32 4, %s28
          %508 = vsyncadd %s474, 0
          %s509 = sadd.s32 %s29, %s506
          %s510 = smul.addr %s27, 4
          %s511 = sadd.s32 %s509, %s510
          %s512 = smul.addr %s511, 4
          %s513 = scalar_lea.hbm %s3, %s512
          %s514 = sshll.u32 %s477, 4
          %s515 = int_to_ptr.vmem [resolvable:$true] %s514
          %s516 = sshll.u32 %s513, 4
          %s517 = int_to_ptr.hbm [resolvable:$true] %s516
          %522 = dma.vmem_to_hbm [thread:$0]  %s515, 256, %s517, %s474, 64, 64, 4
        $region36: #{tpu_custom_call.1} parent=27 // pred_fallthru
          _
        // Predicated region
        $region37: #{tpu_custom_call.1} parent=27 // pred_check
          %p523 = pneg %p177
        $region38: #{tpu_custom_call.1} parent=27 // pred_check_branch
          %525 = sbr.rel (%p523) target = $region40
        $region39: #{tpu_custom_call.1} parent=27 // pred_region
          %s526 = smul.u32 4, %s28
          %528 = vsyncadd %s479, 0
          %s529 = sadd.s32 %s29, %s526
          %s530 = smul.addr %s27, 4
          %s531 = sadd.s32 %s529, %s530
          %s532 = smul.addr %s531, 4
          %s533 = scalar_lea.hbm %s4, %s532
          %s534 = sshll.u32 %s482, 4
          %s535 = int_to_ptr.vmem [resolvable:$true] %s534
          %s536 = sshll.u32 %s533, 4
          %s537 = int_to_ptr.hbm [resolvable:$true] %s536
          %542 = dma.vmem_to_hbm [thread:$0]  %s535, 256, %s537, %s479, 64, 64, 4
        $region40: #{tpu_custom_call.1} parent=27 // pred_fallthru
          _
      $region28: #{tpu_custom_call.1} parent=5 // pred_fallthru
        _
      %p543 = scmp.le.s32.totalorder 2, %s17
      // Predicated region
      $region41: #{tpu_custom_call.1} parent=5 // pred_check
        %p544 = pneg %p543
      $region42: #{tpu_custom_call.1} parent=5 // pred_check_branch
        %546 = sbr.rel (%p544) target = $region44
      $region43: #{tpu_custom_call.1} parent=5 // pred_region
        %s547 = ssub.s32 %s17, 2
        // Predicated region
        $region45: #{tpu_custom_call.1} parent=43 // pred_check
          %p548 = pneg %p123
        $region46: #{tpu_custom_call.1} parent=43 // pred_check_branch
          %550 = sbr.rel (%p548) target = $region48
        $region47: #{tpu_custom_call.1} parent=43 // pred_region
          %s551 = sand.u32 %s108, 1
          %s552 = scalar_lea.sflag [#allocation3], %s551
          %s553 = sand.u32 %s108, 1
          %s554 = smul.addr %s553, 16
          %s555 = scalar_lea.vmem [#allocation2], %s554
          %557 = dma.done %s552, 256
        $region48: #{tpu_custom_call.1} parent=43 // pred_fallthru
          _
        // Predicated region
        $region49: #{tpu_custom_call.1} parent=43 // pred_check
          %p558 = pneg %p153
        $region50: #{tpu_custom_call.1} parent=43 // pred_check_branch
          %560 = sbr.rel (%p558) target = $region52
        $region51: #{tpu_custom_call.1} parent=43 // pred_region
          %s561 = sand.u32 %s23, 1
          %s562 = scalar_lea.sflag [#allocation5], %s561
          %s563 = sand.u32 %s138, 1
          %s564 = smul.addr %s563, 16
          %s565 = scalar_lea.vmem [#allocation4], %s564
          %567 = dma.done %s562, 256
        $region52: #{tpu_custom_call.1} parent=43 // pred_fallthru
          _
        // Predicated region
        $region53: #{tpu_custom_call.1} parent=43 // pred_check
          %p568 = pneg %p183
        $region54: #{tpu_custom_call.1} parent=43 // pred_check_branch
          %570 = sbr.rel (%p568) target = $region56
        $region55: #{tpu_custom_call.1} parent=43 // pred_region
          %s571 = sand.u32 %s23, 1
          %s572 = scalar_lea.sflag [#allocation5], %s571
          %s573 = sand.u32 %s168, 1
          %s574 = smul.addr %s573, 16
          %s575 = scalar_lea.vmem [#allocation6], %s574
          %577 = dma.done %s572, 256
        $region56: #{tpu_custom_call.1} parent=43 // pred_fallthru
          _
      $region44: #{tpu_custom_call.1} parent=5 // pred_fallthru
        _
    $region6: #{tpu_custom_call.1} parent=1 // loop_footer
      %s21 = sadd.s32 1, %s17
    $region7: #{tpu_custom_call.1} parent=1 // loop_footer_branch
      %16 = sbr.rel target = $region3
    $region8: #{tpu_custom_call.1} parent=1 // loop_exit
      _
    %578 = vsyncpa [#allocation3], 1
    %s579 = scalar_lea.sflag [#allocation3], 1
    %580 = vsyncpa %s579, 1
    %581 = vsyncpa [#allocation5], 1
    %s582 = scalar_lea.sflag [#allocation5], 1
    %583 = vsyncpa %s582, 1

</llo_original>
